<compile_context>
chip_gen: v6e
topology: v6e:2x2x1
jax: 0.10.0
libtpu: 0.0.40
codegen_flags: <defaults>
</compile_context>

<pallas_src>
import jax
import jax.numpy as jnp
from jax.experimental import pallas as pl
from jax.experimental.pallas import tpu as pltpu


# ---------------------------------------------------------------------------
# Kernels
# ---------------------------------------------------------------------------
def fc_kernel_single_k(x_ref, wt_ref, shift_ref, o_ref):
    # Whole contraction in one MXU pass: no accumulator scratch, no K axis.
    y = jnp.dot(x_ref[...], wt_ref[...], preferred_element_type=jnp.float32)
    y = y + shift_ref[...]
    o_ref[...] = jnp.maximum(y, 0.0).astype(o_ref.dtype)


def fc_kernel_ksplit(x_ref, wt_ref, shift_ref, o_ref, acc_ref):
    # Large-K path: f32 accumulator lives across the trailing "arbitrary" axis.
    k = pl.program_id(2)

    @pl.when(k == 0)
    def _():
        acc_ref[...] = jnp.zeros_like(acc_ref)

    acc_ref[...] += jnp.dot(x_ref[...], wt_ref[...],
                            preferred_element_type=jnp.float32)

    @pl.when(k == pl.num_programs(2) - 1)
    def _():
        y = acc_ref[...] + shift_ref[...]
        o_ref[...] = jnp.maximum(y, 0.0).astype(o_ref.dtype)


# ---------------------------------------------------------------------------
# Helpers
# ---------------------------------------------------------------------------
def _round_up(x, m):
    return (x + m - 1) // m * m


def _pick_tile(dim, max_tile, unit):
    """Largest multiple of `unit` that is <= max_tile and divides
    round_up(dim, unit) — keeps padding at `unit` granularity only."""
    padded = _round_up(max(dim, 1), unit)
    best = unit
    t = unit
    top = min(max_tile, padded)
    while t <= top:
        if padded % t == 0:
            best = t
        t += unit
    return best


def _tile_defaults():
    """Generation-aware max tile sizes (tm, tn, tk)."""
    try:
        kind = jax.devices()[0].device_kind.lower()
    except Exception:  # pragma: no cover
        kind = ""
    if "v5 lite" in kind or "v5e" in kind or "v5litepod" in kind:
        # v5e: 197 TF/s vs 0.82 TB/s, 16 MiB scoped-VMEM default.
        return 512, 512, 1024
    # v6e / v7x (and fallback): ~12 MiB double-buffered at these tiles.
    return 512, 1024, 1024


# ---------------------------------------------------------------------------
# Builder: folds + pads the weights once, returns a jitted apply(x).
# ---------------------------------------------------------------------------
def make_fully_connected(weight, bias, gamma=None, beta=None,
                         running_mean=None, running_var=None, eps=1e-5,
                         *, with_bn=True, use_bf16=True, out_dtype=None,
                         tm_max=None, tn_max=None, tk_max=None):
    """y = relu(bn(x @ W.T + b)) with BN in inference form.

    weight: [out_dim, inp_dim] (PyTorch layout); bias/BN params: [out_dim].
    The folded, padded, bf16-cast weight and shift are cached across calls.
    """
    out_dim, K = weight.shape
    d_tm, d_tn, d_tk = _tile_defaults()
    tm_max = d_tm if tm_max is None else tm_max
    tn_max = d_tn if tn_max is None else tn_max
    tk_max = d_tk if tk_max is None else tk_max

    # ---- fold BN affine + linear bias (all in f32, cast afterwards) --------
    #   (x W^T + b) * s + (beta - mean*s)  =  x (W^T * s) + (b*s + beta - mean*s)
    wt = weight.T.astype(jnp.float32)                         # [K, out_dim]
    if with_bn:
        scale = gamma.astype(jnp.float32) / jnp.sqrt(
            running_var.astype(jnp.float32) + eps)
        shift = (bias.astype(jnp.float32) * scale
                 + beta.astype(jnp.float32)
                 - running_mean.astype(jnp.float32) * scale)
        wt = wt * scale[None, :]
    else:
        shift = bias.astype(jnp.float32)

    mxu_dtype = jnp.bfloat16 if use_bf16 else jnp.float32
    sublane = 16 if use_bf16 else 8

    # ---- K / out_dim tiling (independent of batch N) -----------------------
    k_pad = _round_up(K, 128)
    single_k = k_pad <= tk_max
    tk = k_pad if single_k else _pick_tile(K, tk_max, 128)

    tn = _pick_tile(out_dim, tn_max, 128)
    o_pad = _round_up(out_dim, 128)        # tn divides o_pad by construction

    # ---- fold path runs ONCE; cached padded device arrays ------------------
    wt_p = jnp.pad(wt, ((0, k_pad - K), (0, o_pad - out_dim))).astype(mxu_dtype)
    shift_p = jnp.pad(shift.reshape(1, out_dim), ((0, 0), (0, o_pad - out_dim)))
    wt_p = jax.device_put(wt_p)
    shift_p = jax.device_put(shift_p)

    mxu_bytes = jnp.dtype(mxu_dtype).itemsize

    @jax.jit
    def _apply_impl(x, wt_p, shift_p):
        N = x.shape[0]
        odt = out_dtype if out_dtype is not None else x.dtype

        # Rows tile: sublane granularity (no 128-row padding for tiny N).
        tm = _pick_tile(N, tm_max, sublane)
        n_pad = _round_up(N, tm)
        rows = n_pad // tm
        cols = o_pad // tn
        tn_loc = tn
        # Keep >=2 blocks on a parallel axis so both v7x TensorCores get work;
        # harmless (a couple of extra grid steps) on single-TC chips.
        if rows == 1 and cols == 1 and tn_loc >= 256:
            tn_loc = tn_loc // 2
            cols = o_pad // tn_loc

        x_p = jnp.pad(x.astype(mxu_dtype), ((0, n_pad - N), (0, k_pad - K)))

        flops = 2 * n_pad * k_pad * o_pad
        bytes_accessed = (n_pad * k_pad * mxu_bytes
                          + k_pad * o_pad * mxu_bytes
                          + o_pad * 4
                          + n_pad * o_pad * jnp.dtype(odt).itemsize)
        cost = pl.CostEstimate(flops=flops, transcendentals=0,
                               bytes_accessed=bytes_accessed)

        if single_k:
            # Pick grid order that minimizes HBM re-streaming:
            #  cols-inner : x fetched once/row tile, W re-streamed `rows` times
            #  rows-inner : W fetched once/col tile, x re-streamed `cols` times
            x_bytes = n_pad * k_pad * mxu_bytes
            w_bytes = k_pad * o_pad * mxu_bytes
            rows_inner = (cols * x_bytes + w_bytes) < (x_bytes + rows * w_bytes)
            if rows_inner:
                grid = (cols, rows)
                in_specs = [
                    pl.BlockSpec((tm, k_pad), lambda j, i: (i, 0)),
                    pl.BlockSpec((k_pad, tn_loc), lambda j, i: (0, j)),
                    pl.BlockSpec((1, tn_loc), lambda j, i: (0, j)),
                ]
                out_specs = pl.BlockSpec((tm, tn_loc), lambda j, i: (i, j))
            else:
                grid = (rows, cols)
                in_specs = [
                    pl.BlockSpec((tm, k_pad), lambda i, j: (i, 0)),
                    pl.BlockSpec((k_pad, tn_loc), lambda i, j: (0, j)),
                    pl.BlockSpec((1, tn_loc), lambda i, j: (0, j)),
                ]
                out_specs = pl.BlockSpec((tm, tn_loc), lambda i, j: (i, j))

            out = pl.pallas_call(
                fc_kernel_single_k,
                out_shape=jax.ShapeDtypeStruct((n_pad, o_pad), odt),
                grid_spec=pltpu.PrefetchScalarGridSpec(
                    num_scalar_prefetch=0,
                    grid=grid,
                    in_specs=in_specs,
                    out_specs=out_specs,
                ),
                compiler_params=pltpu.CompilerParams(
                    dimension_semantics=("parallel", "parallel")),
                cost_estimate=cost,
            )(x_p, wt_p, shift_p)
        else:
            ksteps = k_pad // tk
            out = pl.pallas_call(
                fc_kernel_ksplit,
                out_shape=jax.ShapeDtypeStruct((n_pad, o_pad), odt),
                grid_spec=pltpu.PrefetchScalarGridSpec(
                    num_scalar_prefetch=0,
                    grid=(rows, cols, ksteps),
                    in_specs=[
                        pl.BlockSpec((tm, tk), lambda i, j, k: (i, k)),
                        pl.BlockSpec((tk, tn_loc), lambda i, j, k: (k, j)),
                        pl.BlockSpec((1, tn_loc), lambda i, j, k: (0, j)),
                    ],
                    out_specs=pl.BlockSpec((tm, tn_loc), lambda i, j, k: (i, j)),
                    scratch_shapes=[pltpu.VMEM((tm, tn_loc), jnp.float32)],
                ),
                compiler_params=pltpu.CompilerParams(
                    dimension_semantics=("parallel", "parallel", "arbitrary")),
                cost_estimate=cost,
            )(x_p, wt_p, shift_p)

        return out[:N, :out_dim]

    def apply(x):
        return _apply_impl(x, wt_p, shift_p)

    return apply


if __name__ == "__main__":
    key = jax.random.PRNGKey(0)
    # Small shapes, intentionally NOT tile multiples (exercise padding paths).
    N, inp_dim, out_dim = 10, 32, 200

    k_x, k_w, k_b, k_g, k_be, k_m, k_v = jax.random.split(key, 7)
    x = jax.random.normal(k_x, (N, inp_dim), jnp.float32)
    # PyTorch Linear params: weight [out_dim, inp_dim], bias [out_dim]
    weight = jax.random.normal(k_w, (out_dim, inp_dim), jnp.float32) * 0.1
    bias = jax.random.normal(k_b, (out_dim,), jnp.float32) * 0.1
    # BatchNorm1d params + running stats (inference-mode BN)
    gamma = 1.0 + 0.1 * jax.random.normal(k_g, (out_dim,), jnp.float32)
    beta = 0.1 * jax.random.normal(k_be, (out_dim,), jnp.float32)
    running_mean = 0.1 * jax.random.normal(k_m, (out_dim,), jnp.float32)
    running_var = jnp.abs(1.0 + 0.1 * jax.random.normal(k_v, (out_dim,),
                                                        jnp.float32))
    eps = 1e-5

    # --- with BN (folded weight cached inside the returned apply fn) ---
    fc_bn = make_fully_connected(weight, bias, gamma, beta,
                                 running_mean, running_var, eps, with_bn=True)
    out = jax.block_until_ready(fc_bn(x))

    ref = x @ weight.T + bias
    ref = (ref - running_mean) / jnp.sqrt(running_var + eps) * gamma + beta
    ref = jnp.maximum(ref, 0.0)
    assert out.shape == ref.shape
    # bf16 MXU path -> relaxed tolerance vs the f32 reference.
    assert jnp.allclose(out, ref, atol=2e-2, rtol=2e-2), "mismatch (with_bn=True)"

    # Second call reuses the cached folded weight + compiled kernel.
    out_again = jax.block_until_ready(fc_bn(x))
    assert jnp.allclose(out_again, out), "cached-call mismatch"

    # --- without BN ---
    fc_nobn = make_fully_connected(weight, bias, with_bn=False)
    out2 = jax.block_until_ready(fc_nobn(x))
    ref2 = jnp.maximum(x @ weight.T + bias, 0.0)
    assert jnp.allclose(out2, ref2, atol=2e-2, rtol=2e-2), "mismatch (with_bn=False)"

    print("KERNEL_OK")
</pallas_src>

<mosaic_0001>
module attributes {stable_mosaic.version = 11 : i64} {
  func.func @fc_kernel_single_k(%arg0: i32, %arg1: i32, %arg2: memref<16x128xbf16, #tpu.memory_space<vmem>>, %arg3: memref<128x128xbf16, #tpu.memory_space<vmem>>, %arg4: memref<1x128xf32, #tpu.memory_space<vmem>>, %arg5: memref<16x128xf32, #tpu.memory_space<vmem>>) attributes {dimension_semantics = [#tpu.dimension_semantics<parallel>, #tpu.dimension_semantics<parallel>], iteration_bounds = array<i64: 1, 2>, scalar_prefetch = 0 : i64, scratch_operands = 0 : i64, tpu.core_type = #tpu.core_type<tc>, window_params = [{transform_indices = @transform_0, window_bounds = array<i64: 16, 128>}, {transform_indices = @transform_1, window_bounds = array<i64: 128, 128>}, {transform_indices = @transform_2, window_bounds = array<i64: 1, 128>}, {transform_indices = @transform_3, window_bounds = array<i64: 16, 128>}]} {
    %c0 = arith.constant 0 : index
    %c0_0 = arith.constant 0 : index
    %0 = vector.load %arg2[%c0, %c0_0] : memref<16x128xbf16, #tpu.memory_space<vmem>>, vector<16x128xbf16>
    %c0_1 = arith.constant 0 : index
    %c0_2 = arith.constant 0 : index
    %1 = vector.load %arg3[%c0_1, %c0_2] : memref<128x128xbf16, #tpu.memory_space<vmem>>, vector<128x128xbf16>
    %cst = arith.constant dense<0.000000e+00> : vector<16x128xf32>
    %2 = tpu.matmul %0, %1, %cst {dimension_numbers = #tpu.dot_dimension_numbers<[1], [0], [0], [1], [0, 0, 1, 1], [], []>} : vector<16x128xbf16>, vector<128x128xbf16>, vector<16x128xf32> -> vector<16x128xf32>
    %c0_3 = arith.constant 0 : index
    %c0_4 = arith.constant 0 : index
    %3 = vector.load %arg4[%c0_3, %c0_4] : memref<1x128xf32, #tpu.memory_space<vmem>>, vector<1x128xf32>
    %4 = vector.broadcast %3 : vector<1x128xf32> to vector<16x128xf32>
    %5 = arith.addf %2, %4 : vector<16x128xf32>
    %cst_5 = arith.constant 0.000000e+00 : f32
    %6 = vector.broadcast %cst_5 : f32 to vector<16x128xf32>
    %7 = arith.maximumf %5, %6 : vector<16x128xf32>
    %c0_6 = arith.constant 0 : index
    %c0_7 = arith.constant 0 : index
    %8 = vector.load %arg5[%c0_6, %c0_7] : memref<16x128xf32, #tpu.memory_space<vmem>>, vector<16x128xf32>
    tpu.vector_store %arg5[%c0_6, %c0_7], %7 {strides = array<i32>} : memref<16x128xf32, #tpu.memory_space<vmem>>, vector<16x128xf32>,
    return
  }
  func.func @transform_0(%arg0: i32, %arg1: i32) -> (i32, i32) {
    %c0_i32 = arith.constant 0 : i32
    %c0_i32_0 = arith.constant 0 : i32
    return %arg0, %c0_i32 : i32, i32
  }
  func.func @transform_1(%arg0: i32, %arg1: i32) -> (i32, i32) {
    %c0_i32 = arith.constant 0 : i32
    %c0_i32_0 = arith.constant 0 : i32
    return %c0_i32, %arg1 : i32, i32
  }
  func.func @transform_2(%arg0: i32, %arg1: i32) -> (i32, i32) {
    %c0_i32 = arith.constant 0 : i32
    %c0_i32_0 = arith.constant 0 : i32
    return %c0_i32, %arg1 : i32, i32
  }
  func.func @transform_3(%arg0: i32, %arg1: i32) -> (i32, i32) {
    %c0_i32 = arith.constant 0 : i32
    return %arg0, %arg1 : i32, i32
  }
}

</mosaic_0001>

<llo_original>
// kernel: _apply_impl.1
$region0: #{_apply_impl.1}
  #allocation0 [shape = 'u32[]', space=smem, size = 0x4, offset = 0x4, fixed_abs, tag = 'smem constant byte address 0x4 - core index']
  #allocation1 [shape = 'u32[144,128]{1,0:T(1,128)}', space=vmem, size = 0x12000, scoped, tag = 'internal scratch']
  %s0 = inlined_call_operand.vmem [shape: bf16[16,128], index: 0, kind: input, shape index: {}]
  %s1 = inlined_call_operand.hbm [shape: bf16[128,256], index: 1, kind: input, shape index: {}]
  %s2 = inlined_call_operand.vmem [shape: f32[1,256], index: 2, kind: input, shape index: {}]
  %s3 = inlined_call_operand.hbm [shape: f32[16,256], index: 3, kind: output, shape index: {}]
  %s4 = sld [smem:[#allocation0]]
  $region49: #{_apply_impl.1} parent=0
    _
  %s6 = ssub.s32 1, %s4
  %s7 = scalar_select 0, %s6, %s4
  $region1: #{_apply_impl.1} parent=0
    #allocation2 [shape = 'u8[65536]{0}', space=vmem, size = 0x10000, scoped, tag = 'input window, operand 1']
    #allocation3 [shape = 's32[2]{0}', space=sflag, size = 0x8, scoped, tag = 'scoped memory for _apply_impl.1']
    #allocation4 [shape = 's32[2]{0}', space=sflag, size = 0x8, scoped, tag = 'scoped memory for _apply_impl.1']
    #allocation5 [shape = 'u8[16384]{0}', space=vmem, size = 0x4000, scoped, tag = 'output window, operand 0']
    %8 = vsyncpa [#allocation3], 0
    %s9 = scalar_lea.sflag [#allocation3], 1
    %10 = vsyncpa %s9, 0
    %11 = vsyncpa [#allocation4], 0
    %s12 = scalar_lea.sflag [#allocation4], 1
    %13 = vsyncpa %s12, 0
    loop: start=0, step=1, limit=4
    $region2: #{_apply_impl.1} parent=1 // loop_pre_header
      _
    $region3: #{_apply_impl.1} parent=1 // loop_header
      %s15 = sphi 0, %s19
      %p16 = scmp.ge.s32.totalorder %s15, 4
      %s22 = sphi 0, %s34
      %s23 = sphi 0, %s30
      %s24 = sphi 0, %s22
      %s25 = sphi 0, %s23
      %s26 = sphi 0, %s24
      %s27 = sphi 0, %s25
      %s37 = sphi 0, %s39
      %s40 = sphi 0, %s37
      %s41 = sphi 0, %s40
      %s57 = sphi 0, %s41
      %s63 = sphi 0, %s65
      %s66 = sphi 0, %s63
      %s67 = sphi 0, %s66
      %s83 = sphi 0, %s67
      %s89 = sphi 0, %s91
      %s92 = sphi 0, %s89
      %s93 = sphi 0, %s92
      %s109 = sphi 0, %s93
      %s117 = sphi 0, %s119
      %s120 = sphi 0, %s117
      %s121 = sphi 0, %s120
      %s137 = sphi 0, %s121
    $region4: #{_apply_impl.1} parent=1 // loop_header_branch
      %18 = sbr.rel (%p16) target = $region8
    $region5: #{_apply_impl.1} parent=1 // loop_body
      %s20 = ssub.s32 %s15, 1
      %s21 = ssub.s32 %s15, 2
      %s28 = sadd.s32 1, %s23
      %p29 = scmp.ge.s32.totalorder %s28, 2
      %s30 = scalar_select %p29, 0, %s28
      %s31 = sadd.s32 1, %s22
      %s32 = scalar_select %p29, %s31, %s22
      %p33 = scmp.ge.s32.totalorder %s32, 1
      %s34 = scalar_select %p33, 0, %s32
      %s35 = ssub.s32 %s22, %s34
      %p36 = scmp.eq.s32.totalorder %s35, 0
      %s38 = sadd.s32 %s37, 1
      %s39 = scalar_select %p36, %s37, %s38
      %p42 = pneg %p36
      %p43 = scmp.eq.s32.totalorder %s15, 1
      %p44 = por %p42, %p43
      %p45 = scmp.ne.s32.totalorder %s37, %s40
      %p46 = scmp.eq.s32.totalorder %s15, 0
      %p47 = por %p45, %p46
      %p48 = scmp.ne.s32.totalorder %s37, %s40
      %p49 = scmp.eq.s32.totalorder %s20, 1
      %p50 = por %p48, %p49
      %p51 = scmp.ne.s32.totalorder %s40, %s41
      %p52 = scmp.eq.s32.totalorder %s20, 0
      %p53 = por %p51, %p52
      %p54 = scmp.ne.s32.totalorder %s40, %s41
      %p55 = scmp.eq.s32.totalorder %s21, 1
      %p56 = por %p54, %p55
      %p58 = scmp.ne.s32.totalorder %s41, %s57
      %p59 = scmp.eq.s32.totalorder %s21, 0
      %p60 = por %p58, %p59
      %s61 = ssub.s32 %s23, %s30
      %p62 = scmp.eq.s32.totalorder %s61, 0
      %s64 = sadd.s32 %s63, 1
      %s65 = scalar_select %p62, %s63, %s64
      %p68 = pneg %p62
      %p69 = scmp.eq.s32.totalorder %s15, 1
      %p70 = por %p68, %p69
      %p71 = scmp.ne.s32.totalorder %s63, %s66
      %p72 = scmp.eq.s32.totalorder %s15, 0
      %p73 = por %p71, %p72
      %p74 = scmp.ne.s32.totalorder %s63, %s66
      %p75 = scmp.eq.s32.totalorder %s20, 1
      %p76 = por %p74, %p75
      %p77 = scmp.ne.s32.totalorder %s66, %s67
      %p78 = scmp.eq.s32.totalorder %s20, 0
      %p79 = por %p77, %p78
      %p80 = scmp.ne.s32.totalorder %s66, %s67
      %p81 = scmp.eq.s32.totalorder %s21, 1
      %p82 = por %p80, %p81
      %p84 = scmp.ne.s32.totalorder %s67, %s83
      %p85 = scmp.eq.s32.totalorder %s21, 0
      %p86 = por %p84, %p85
      %s87 = ssub.s32 %s23, %s30
      %p88 = scmp.eq.s32.totalorder %s87, 0
      %s90 = sadd.s32 %s89, 1
      %s91 = scalar_select %p88, %s89, %s90
      %p94 = pneg %p88
      %p95 = scmp.eq.s32.totalorder %s15, 1
      %p96 = por %p94, %p95
      %p97 = scmp.ne.s32.totalorder %s89, %s92
      %p98 = scmp.eq.s32.totalorder %s15, 0
      %p99 = por %p97, %p98
      %p100 = scmp.ne.s32.totalorder %s89, %s92
      %p101 = scmp.eq.s32.totalorder %s20, 1
      %p102 = por %p100, %p101
      %p103 = scmp.ne.s32.totalorder %s92, %s93
      %p104 = scmp.eq.s32.totalorder %s20, 0
      %p105 = por %p103, %p104
      %p106 = scmp.ne.s32.totalorder %s92, %s93
      %p107 = scmp.eq.s32.totalorder %s21, 1
      %p108 = por %p106, %p107
      %p110 = scmp.ne.s32.totalorder %s93, %s109
      %p111 = scmp.eq.s32.totalorder %s21, 0
      %p112 = por %p110, %p111
      %s113 = ssub.s32 %s22, %s34
      %s114 = ssub.s32 %s23, %s30
      %s115 = sor.u32 %s113, %s114
      %p116 = scmp.eq.s32.totalorder %s115, 0
      %s118 = sadd.s32 %s117, 1
      %s119 = scalar_select %p116, %s117, %s118
      %p122 = pneg %p116
      %p123 = scmp.eq.s32.totalorder %s15, 1
      %p124 = por %p122, %p123
      %p125 = scmp.ne.s32.totalorder %s117, %s120
      %p126 = scmp.eq.s32.totalorder %s15, 0
      %p127 = por %p125, %p126
      %p128 = scmp.ne.s32.totalorder %s117, %s120
      %p129 = scmp.eq.s32.totalorder %s20, 1
      %p130 = por %p128, %p129
      %p131 = scmp.ne.s32.totalorder %s120, %s121
      %p132 = scmp.eq.s32.totalorder %s20, 0
      %p133 = por %p131, %p132
      %p134 = scmp.ne.s32.totalorder %s120, %s121
      %p135 = scmp.eq.s32.totalorder %s21, 1
      %p136 = por %p134, %p135
      %p138 = scmp.ne.s32.totalorder %s121, %s137
      %p139 = scmp.eq.s32.totalorder %s21, 0
      %p140 = por %p138, %p139
      %p141 = scmp.le.s32.totalorder 1, %s15
      %p142 = scmp.lt.s32.totalorder %s15, 3
      %p143 = pnand %p141, %p142
      %p144 = pneg %p143
      // Predicated region
      $region9: #{_apply_impl.1} parent=5 // pred_check
        _
      $region10: #{_apply_impl.1} parent=5 // pred_check_branch
        %146 = sbr.rel (%p143) target = $region12
      $region11: #{_apply_impl.1} parent=5 // pred_region
        %s147 = ssub.s32 %s15, 1
        // Predicated region
        $region13: #{_apply_impl.1} parent=11 // pred_check
          %p148 = pneg %p53
        $region14: #{_apply_impl.1} parent=11 // pred_check_branch
          %150 = sbr.rel (%p148) target = $region16
        $region15: #{_apply_impl.1} parent=11 // pred_region
          %s151 = smul.u32 2, %s24
          %p152 = scmp.lt.s32.totalorder %s151, 1
          %s153 = scalar_select %p152, %s151, 1
          %s154 = smul.addr %s153, 4
          %s155 = scalar_lea.vmem %s0, %s154
          %s156 = smul.u32 2, %s24
        $region16: #{_apply_impl.1} parent=11 // pred_fallthru
          _
      $region12: #{_apply_impl.1} parent=5 // pred_fallthru
        _
      %p157 = scmp.lt.s32.totalorder %s15, 2
      // Predicated region
      $region17: #{_apply_impl.1} parent=5 // pred_check
        %p158 = pneg %p157
      $region18: #{_apply_impl.1} parent=5 // pred_check_branch
        %160 = sbr.rel (%p158) target = $region20
      $region19: #{_apply_impl.1} parent=5 // pred_region
        // Predicated region
        $region21: #{_apply_impl.1} parent=19 // pred_check
          %p161 = pneg %p73
        $region22: #{_apply_impl.1} parent=19 // pred_check_branch
          %163 = sbr.rel (%p161) target = $region24
        $region23: #{_apply_impl.1} parent=19 // pred_region
          %s164 = sand.u32 %s63, 1
          %s165 = scalar_lea.sflag [#allocation3], %s164
          %s166 = sand.u32 %s63, 1
          %s167 = smul.addr %s166, 64
          %s168 = scalar_lea.vmem [#allocation2], %s167
          %s170 = ssub.s32 1024, 1024
          %171 = vsyncadd %s165, %s170
          %s172 = smul.addr %s23, 64
          %s173 = scalar_lea.hbm %s1, %s172
          %s174 = sshll.u32 %s168, 4
          %s175 = int_to_ptr.vmem [resolvable:$true] %s174
          %180 = dma.hbm_to_vmem [thread:$0]  %s173, 1024, %s175, %s165, 128, 64, 4
        $region24: #{_apply_impl.1} parent=19 // pred_fallthru
          _
        // Predicated region
        $region25: #{_apply_impl.1} parent=19 // pred_check
          %p181 = pneg %p99
        $region26: #{_apply_impl.1} parent=19 // pred_check_branch
          %183 = sbr.rel (%p181) target = $region28
        $region27: #{_apply_impl.1} parent=19 // pred_region
          %p184 = scmp.lt.s32.totalorder %s23, 1
          %s185 = scalar_select %p184, %s23, 1
          %s186 = scalar_lea.vmem %s2, %s185
        $region28: #{_apply_impl.1} parent=19 // pred_fallthru
          _
      $region20: #{_apply_impl.1} parent=5 // pred_fallthru
        _
      %p187 = scmp.le.s32.totalorder 1, %s15
      %p188 = scmp.lt.s32.totalorder %s15, 3
      %p189 = pnand %p187, %p188
      %p190 = pneg %p189
      // Predicated region
      $region29: #{_apply_impl.1} parent=5 // pred_check
        _
      $region30: #{_apply_impl.1} parent=5 // pred_check_branch
        %192 = sbr.rel (%p189) target = $region32
      $region31: #{_apply_impl.1} parent=5 // pred_region
        %s193 = ssub.s32 %s15, 1
        %s194 = sand.u32 %s66, 1
        %s195 = scalar_lea.sflag [#allocation3], %s194
        %s196 = sand.u32 %s66, 1
        %s197 = smul.addr %s196, 64
        %s198 = scalar_lea.vmem [#allocation2], %s197
        // Predicated region
        $region33: #{_apply_impl.1} parent=31 // pred_check
          %p199 = pneg %p79
        $region34: #{_apply_impl.1} parent=31 // pred_check_branch
          %201 = sbr.rel (%p199) target = $region36
        $region35: #{_apply_impl.1} parent=31 // pred_region
          %202 = dma.done %s195, 1024
        $region36: #{_apply_impl.1} parent=31 // pred_fallthru
          _
        %s203 = smul.u32 2, %s24
        %p204 = scmp.lt.s32.totalorder %s203, 1
        %s205 = scalar_select %p204, %s203, 1
        %s206 = smul.addr %s205, 4
        %s207 = scalar_lea.vmem %s0, %s206
        %p208 = pneg %p53
        %p209 = pneg %p50
        %s210 = sand.u32 %s66, 1
        %s211 = scalar_lea.sflag [#allocation3], %s210
        %s212 = sand.u32 %s66, 1
        %s213 = smul.addr %s212, 64
        %s214 = scalar_lea.vmem [#allocation2], %s213
        %p215 = pneg %p79
        %p216 = pneg %p76
        %p217 = scmp.lt.s32.totalorder %s25, 1
        %s218 = scalar_select %p217, %s25, 1
        %s219 = scalar_lea.vmem %s2, %s218
        %p220 = pneg %p105
        %p221 = pneg %p102
        %p222 = pneg %p133
        %p223 = pneg %p130
        %s224 = sand.u32 %s120, 1
        %s225 = scalar_lea.sflag [#allocation4], %s224
        %s226 = sand.u32 %s120, 1
        %s227 = smul.addr %s226, 16
        %s228 = scalar_lea.vmem [#allocation5], %s227
        %s229 = smul.u32 2, %s24
        %p230 = scmp.lt.s32.totalorder %s229, 1
        %s231 = scalar_select %p230, %s229, 1
        %s232 = smul.addr %s231, 4
        %s233 = scalar_lea.vmem %s0, %s232
        %s234 = smul.u32 2, %s24
        %p235 = scmp.lt.s32.totalorder %s25, 1
        %s236 = scalar_select %p235, %s25, 1
        %s237 = scalar_lea.vmem %s2, %s236
        %s238 = smul.u32 2, %s24
        %v240 = vld [vmem:[%s233] sm:$0xf]
        %v241 = vld [vmem:[%s233 + $0x4] sm:$0xf]
        %v242 = vld [vmem:[%s198] sm:$0xf]
        %v243 = vld [vmem:[%s198 + $0x4] sm:$0xf]
        %v244 = vld [vmem:[%s198 + $0x8] sm:$0xf]
        %v245 = vld [vmem:[%s198 + $0xc] sm:$0xf]
        %v246 = vld [vmem:[%s198 + $0x10] sm:$0xf]
        %v247 = vld [vmem:[%s198 + $0x14] sm:$0xf]
        %v248 = vld [vmem:[%s198 + $0x18] sm:$0xf]
        %v249 = vld [vmem:[%s198 + $0x1c] sm:$0xf]
        %v250 = vld [vmem:[%s198 + $0x20] sm:$0xf]
        %v251 = vld [vmem:[%s198 + $0x24] sm:$0xf]
        %v252 = vld [vmem:[%s198 + $0x28] sm:$0xf]
        %v253 = vld [vmem:[%s198 + $0x2c] sm:$0xf]
        %v254 = vld [vmem:[%s198 + $0x30] sm:$0xf]
        %v255 = vld [vmem:[%s198 + $0x34] sm:$0xf]
        %v256 = vld [vmem:[%s198 + $0x38] sm:$0xf]
        %v257 = vld [vmem:[%s198 + $0x3c] sm:$0xf]
        %v258 = vld [vmem:[%s237] sm:$0x1]
        %v260 = vlaneseq
        %v261 = vshrl.u32 %v260, 7
        %v262 = vsub.s32 0, %v261
        %v263 = vrot.slane %v258, %v262
        %v267 = vunpack.c.l.b16 %v240
        %v268 = vunpack.c.l.b16 %v241
        %v269 = vpack.c.b16 %v268, %v267
        %v287 = vunpack.c.l.b16 %v242
        %v288 = vunpack.c.l.b16 %v243
        %v289 = vunpack.c.l.b16 %v244
        %v290 = vunpack.c.l.b16 %v245
        %v291 = vunpack.c.l.b16 %v246
        %v292 = vunpack.c.l.b16 %v247
        %v293 = vunpack.c.l.b16 %v248
        %v294 = vunpack.c.l.b16 %v249
        %v295 = vunpack.c.l.b16 %v250
        %v296 = vunpack.c.l.b16 %v251
        %v297 = vunpack.c.l.b16 %v252
        %v298 = vunpack.c.l.b16 %v253
        %v299 = vunpack.c.l.b16 %v254
        %v300 = vunpack.c.l.b16 %v255
        %v301 = vunpack.c.l.b16 %v256
        %v302 = vunpack.c.l.b16 %v257
        %v303 = vpack.c.b16 %v288, %v287
        %v304 = vpack.c.b16 %v290, %v289
        %v305 = vpack.c.b16 %v292, %v291
        %v306 = vpack.c.b16 %v294, %v293
        %v307 = vpack.c.b16 %v296, %v295
        %v308 = vpack.c.b16 %v298, %v297
        %v309 = vpack.c.b16 %v300, %v299
        %v310 = vpack.c.b16 %v302, %v301
        %319 = vmatprep.subr.bf16.mxu0 0
        %320 = vmatpush1.bf16.msra.mxu0 %v310
        %321 = vmatprep.subr.bf16.mxu0 0
        %322 = vmatpush1.bf16.msra.mxu0 %v309
        %323 = vmatprep.subr.bf16.mxu0 0
        %324 = vmatpush1.bf16.msra.mxu0 %v308
        %325 = vmatprep.subr.bf16.mxu0 0
        %326 = vmatpush1.bf16.msra.mxu0 %v307
        %327 = vmatprep.subr.bf16.mxu0 0
        %328 = vmatpush1.bf16.msra.mxu0 %v306
        %329 = vmatprep.subr.bf16.mxu0 0
        %330 = vmatpush1.bf16.msra.mxu0 %v305
        %331 = vmatprep.subr.bf16.mxu0 0
        %332 = vmatpush1.bf16.msra.mxu0 %v304
        %333 = vmatprep.subr.bf16.mxu0 0
        %334 = vmatpush1.bf16.msra.mxu0 %v303
        %335 = vmatprep.subr.bf16.mxu0 0
        %336 = vmatpush2.bf16.msra.mxu0 0
        %337 = vmatprep.subr.bf16.mxu0 0
        %338 = vmatpush2.bf16.msra.mxu0 0
        %339 = vmatprep.subr.bf16.mxu0 0
        %340 = vmatpush2.bf16.msra.mxu0 0
        %341 = vmatprep.subr.bf16.mxu0 0
        %342 = vmatpush2.bf16.msra.mxu0 0
        %343 = vmatprep.subr.bf16.mxu0 0
        %344 = vmatpush2.bf16.msra.mxu0 0
        %345 = vmatprep.subr.bf16.mxu0 0
        %346 = vmatpush2.bf16.msra.mxu0 0
        %347 = vmatprep.subr.bf16.mxu0 0
        %348 = vmatpush2.bf16.msra.mxu0 0
        %349 = vmatprep.subr.bf16.mxu0 0
        %350 = vmatpush2.bf16.msra.mxu0 0
        %351 = vmatprep.mubr.bf16.mxu0 0
        %352 = vmatmul.mubr.bf16.gmra.mxu0 %v269
        %v353 = vpop.f32.mrf.mxu0
        %v354 = vadd.f32 %v263, %v353
        %v355 = vpop.f32.mrf.mxu0
        %v356 = vpop.f32.mrf.mxu0
        %v357 = vadd.f32 %v263, %v356
        %v358 = vpop.f32.mrf.mxu0
        %359 = vdwg.mxu0
        %v360 = vmax.f32 %v354, 0.0
        %v361 = vmax.f32 %v357, 0.0
        %362 = vst [vmem:[%s228] sm:$0xff] %v360
        %363 = vst [vmem:[%s228 + $0x8] sm:$0xff] %v361
        %s364 = sand.u32 %s120, 1
        %s365 = scalar_lea.sflag [#allocation4], %s364
        %s366 = sand.u32 %s120, 1
        %s367 = smul.addr %s366, 16
        %s368 = scalar_lea.vmem [#allocation5], %s367
        // Predicated region
        $region37: #{_apply_impl.1} parent=31 // pred_check
          %p369 = pneg %p130
        $region38: #{_apply_impl.1} parent=31 // pred_check_branch
          %371 = sbr.rel (%p369) target = $region40
        $region39: #{_apply_impl.1} parent=31 // pred_region
          %s372 = smul.u32 2, %s24
          %s374 = ssub.s32 256, 256
          %375 = vsyncadd %s365, %s374
          %s376 = smul.addr %s372, 2
          %s377 = sadd.s32 %s25, %s376
          %s378 = smul.addr %s377, 128
          %s379 = scalar_lea.hbm %s3, %s378
          %s380 = sshll.u32 %s368, 4
          %s381 = int_to_ptr.vmem [resolvable:$true] %s380
          %386 = dma.vmem_to_hbm [thread:$0]  %s381, 256, %s379, %s365, 128, 256, 8
        $region40: #{_apply_impl.1} parent=31 // pred_fallthru
          _
      $region32: #{_apply_impl.1} parent=5 // pred_fallthru
        _
      %p387 = scmp.le.s32.totalorder 2, %s15
      // Predicated region
      $region41: #{_apply_impl.1} parent=5 // pred_check
        %p388 = pneg %p387
      $region42: #{_apply_impl.1} parent=5 // pred_check_branch
        %390 = sbr.rel (%p388) target = $region44
      $region43: #{_apply_impl.1} parent=5 // pred_region
        %s391 = ssub.s32 %s15, 2
        // Predicated region
        $region45: #{_apply_impl.1} parent=43 // pred_check
          %p392 = pneg %p136
        $region46: #{_apply_impl.1} parent=43 // pred_check_branch
          %394 = sbr.rel (%p392) target = $region48
        $region47: #{_apply_impl.1} parent=43 // pred_region
          %s395 = sand.u32 %s121, 1
          %s396 = scalar_lea.sflag [#allocation4], %s395
          %s397 = sand.u32 %s121, 1
          %s398 = smul.addr %s397, 16
          %s399 = scalar_lea.vmem [#allocation5], %s398
          %400 = dma.done %s396, 256
        $region48: #{_apply_impl.1} parent=43 // pred_fallthru
          _
      $region44: #{_apply_impl.1} parent=5 // pred_fallthru
        _
    $region6: #{_apply_impl.1} parent=1 // loop_footer
      %s19 = sadd.s32 1, %s15
    $region7: #{_apply_impl.1} parent=1 // loop_footer_branch
      %14 = sbr.rel target = $region3
    $region8: #{_apply_impl.1} parent=1 // loop_exit
      _
    %401 = vsyncpa [#allocation3], 1
    %s402 = scalar_lea.sflag [#allocation3], 1
    %403 = vsyncpa %s402, 1
    %404 = vsyncpa [#allocation4], 1
    %s405 = scalar_lea.sflag [#allocation4], 1
    %406 = vsyncpa %s405, 1

</llo_original>
